<compile_context>
chip_gen: v6e
topology: v6e:2x2x1
jax: 0.10.0
libtpu: 0.0.40
codegen_flags: <defaults>
</compile_context>

<pallas_src>
import math
import functools

import jax
import jax.numpy as jnp
from jax.experimental import pallas as pl
from jax.experimental.pallas import tpu as pltpu


def _round_up(x, m):
    return (x + m - 1) // m * m


def timestep_embedder_kernel(t_ref, freqs_ref, w1_ref, b1_ref, w2_ref, b2_ref, out_ref, *, half):
    # t_ref: (TM, 1) f32, freqs_ref: (1, half) f32, w1_ref: (2*half, Hp) bf16,
    # b1_ref/b2_ref: (1, Hp) f32, w2_ref: (Hp, Hp) bf16, out_ref: (TM, Hp) f32
    args = t_ref[...] * freqs_ref[...]          # (TM, half) f32
    cos = jnp.cos(args)
    sin = jnp.sin(args)

    # emb = [cos, sin] @ W1  ==  cos @ W1[:half] + sin @ W1[half:]
    # (split form avoids the lane-axis concat/relayout; static ref slices are free;
    #  half = 128 so the sublane slice is tile-aligned)
    h = jnp.dot(cos.astype(jnp.bfloat16), w1_ref[:half, :],
                preferred_element_type=jnp.float32)
    h = h + jnp.dot(sin.astype(jnp.bfloat16), w1_ref[half:, :],
                    preferred_element_type=jnp.float32)
    h = h + b1_ref[...]

    # SiLU with one EUP transcendental: x * sigmoid(x) = 0.5 * x * (tanh(x/2) + 1)
    h = 0.5 * h * (jnp.tanh(0.5 * h) + 1.0)

    out = jnp.dot(h.astype(jnp.bfloat16), w2_ref[...],
                  preferred_element_type=jnp.float32)
    out = out + b2_ref[...]
    out_ref[...] = out.astype(out_ref.dtype)


def timestep_embedder(t, params, frequency_embedding_size=256, max_period=10000):
    """t: (N,) array of timesteps. Returns (N, hidden_size) f32."""
    w1, b1, w2, b2 = params
    assert frequency_embedding_size % 2 == 0
    # TODO(synk): odd frequency_embedding_size zero-pad branch of the PyTorch ref is not
    #             implemented (default 256 is even, so it is never taken).
    hidden = w1.shape[1]
    half = frequency_embedding_size // 2
    n = t.shape[0]

    f32, bf16 = jnp.float32, jnp.bfloat16

    # Lane-dense hidden dim: pad H to a multiple of 128. Zero-padded W1 cols / b1 give
    # h_pad_col = 0, SiLU(0) = 0, and zero-padded W2 rows/cols/b2 keep the padded output
    # columns exactly 0, so padding is a no-op on the real outputs.
    h_pad = _round_up(hidden, 128)

    # Batch tiling: one MXU-sized tile of timesteps per grid step; weights stay resident.
    block_m = 256 if n >= 256 else _round_up(max(n, 1), 8)
    n_pad = _round_up(n, block_m)
    grid_m = n_pad // block_m

    # bf16 weights (halve HBM->VMEM DMA), f32 biases.
    w1p = jnp.zeros((frequency_embedding_size, h_pad), bf16).at[:, :hidden].set(w1.astype(bf16))
    w2p = jnp.zeros((h_pad, h_pad), bf16).at[:hidden, :hidden].set(w2.astype(bf16))
    b1p = jnp.zeros((1, h_pad), f32).at[0, :hidden].set(b1.astype(f32))
    b2p = jnp.zeros((1, h_pad), f32).at[0, :hidden].set(b2.astype(f32))

    # Frequency table (tiny, static) precomputed in plain JAX.
    freqs = jnp.exp(
        -math.log(max_period) * jnp.arange(half, dtype=f32) / half
    ).reshape(1, half)
    t2d = jnp.zeros((n_pad, 1), f32).at[:n, 0].set(t.astype(f32))

    # VMEM budget: resident weights + double-buffered t/out tiles + elementwise temps,
    # plus cushion; capped at v7x's 64 MiB physical VMEM.
    weight_bytes = (frequency_embedding_size * h_pad + h_pad * h_pad) * 2 + 2 * h_pad * 4 + half * 4
    io_bytes = 2 * (block_m * 4 + block_m * h_pad * 4)
    temp_bytes = 8 * block_m * max(half, h_pad) * 4
    vmem_bytes = min(64 << 20, max(8 << 20, weight_bytes + io_bytes + temp_bytes + (2 << 20)))

    out = pl.pallas_call(
        functools.partial(timestep_embedder_kernel, half=half),
        out_shape=jax.ShapeDtypeStruct((n_pad, h_pad), f32),
        grid=(grid_m,),
        in_specs=[
            pl.BlockSpec((block_m, 1), lambda i: (i, 0)),                          # t tile
            pl.BlockSpec((1, half), lambda i: (0, 0)),                             # freqs (resident)
            pl.BlockSpec((frequency_embedding_size, h_pad), lambda i: (0, 0)),     # W1 (resident)
            pl.BlockSpec((1, h_pad), lambda i: (0, 0)),                            # b1 (resident)
            pl.BlockSpec((h_pad, h_pad), lambda i: (0, 0)),                        # W2 (resident)
            pl.BlockSpec((1, h_pad), lambda i: (0, 0)),                            # b2 (resident)
        ],
        out_specs=pl.BlockSpec((block_m, h_pad), lambda i: (i, 0)),
        compiler_params=pltpu.CompilerParams(
            dimension_semantics=("parallel",),   # pays off on v7x (2 TCs); no-op on v5e/v6e
            vmem_limit_bytes=vmem_bytes,
        ),
    )(t2d, freqs, w1p, b1p, w2p, b2p)
    return out[:n, :hidden]


def init_params(key, hidden_size, frequency_embedding_size=256):
    # Deterministic synthetic init, mimicking nn.Linear's U(-1/sqrt(fan_in), 1/sqrt(fan_in)).
    k1, k2, k3, k4 = jax.random.split(key, 4)
    lim1 = 1.0 / math.sqrt(frequency_embedding_size)
    lim2 = 1.0 / math.sqrt(hidden_size)
    w1 = jax.random.uniform(k1, (frequency_embedding_size, hidden_size), jnp.float32, -lim1, lim1)
    b1 = jax.random.uniform(k2, (hidden_size,), jnp.float32, -lim1, lim1)
    w2 = jax.random.uniform(k3, (hidden_size, hidden_size), jnp.float32, -lim2, lim2)
    b2 = jax.random.uniform(k4, (hidden_size,), jnp.float32, -lim2, lim2)
    return w1, b1, w2, b2


def timestep_embedder_ref(t, params, frequency_embedding_size=256, max_period=10000,
                          weight_dtype=jnp.float32):
    """Pure-JAX reference matching the PyTorch forward (optionally with bf16 weights)."""
    w1, b1, w2, b2 = params
    half = frequency_embedding_size // 2
    freqs = jnp.exp(-math.log(max_period) * jnp.arange(half, dtype=jnp.float32) / half)
    args = t.astype(jnp.float32)[:, None] * freqs[None, :]
    emb = jnp.concatenate([jnp.cos(args), jnp.sin(args)], axis=-1)
    h = jnp.dot(emb.astype(weight_dtype), w1.astype(weight_dtype),
                preferred_element_type=jnp.float32) + b1
    h = h * jax.nn.sigmoid(h)
    return jnp.dot(h.astype(weight_dtype), w2.astype(weight_dtype),
                   preferred_element_type=jnp.float32) + b2


if __name__ == "__main__":
    hidden_size = 32
    frequency_embedding_size = 256
    n = 8

    key = jax.random.PRNGKey(0)
    k_t, k_p = jax.random.split(key)
    t = jax.random.uniform(k_t, (n,), jnp.float32, 0.0, 1000.0)
    params = init_params(k_p, hidden_size, frequency_embedding_size)

    out = jax.block_until_ready(timestep_embedder(t, params, frequency_embedding_size))
    assert out.shape == (n, hidden_size)

    # Same-precision reference (bf16 weights, f32 accumulation): must match tightly.
    ref_bf16 = timestep_embedder_ref(t, params, frequency_embedding_size, weight_dtype=jnp.bfloat16)
    assert jnp.allclose(out, ref_bf16, atol=5e-3, rtol=5e-3), "mismatch vs bf16-weight reference"

    # Full-f32 PyTorch-semantics reference: only difference is bf16 weight quantization.
    ref_f32 = timestep_embedder_ref(t, params, frequency_embedding_size)
    assert jnp.allclose(out, ref_f32, atol=5e-2, rtol=5e-2), "mismatch vs f32 reference"

    print("KERNEL_OK")
</pallas_src>

<mosaic_0001>
module attributes {stable_mosaic.version = 11 : i64} {
  func.func @timestep_embedder_kernel(%arg0: i32, %arg1: memref<8x1xf32, #tpu.memory_space<vmem>>, %arg2: memref<1x128xf32, #tpu.memory_space<vmem>>, %arg3: memref<256x128xbf16, #tpu.memory_space<vmem>>, %arg4: memref<1x128xf32, #tpu.memory_space<vmem>>, %arg5: memref<128x128xbf16, #tpu.memory_space<vmem>>, %arg6: memref<1x128xf32, #tpu.memory_space<vmem>>, %arg7: memref<8x128xf32, #tpu.memory_space<vmem>>) attributes {dimension_semantics = [#tpu.dimension_semantics<parallel>], iteration_bounds = array<i64: 1>, scalar_prefetch = 0 : i64, scratch_operands = 0 : i64, tpu.core_type = #tpu.core_type<tc>, window_params = [{transform_indices = @transform_0, window_bounds = array<i64: 8, 1>}, {pipeline_mode = #tpu.pipeline_mode<synchronous>, transform_indices = @transform_1, window_bounds = array<i64: 1, 128>}, {pipeline_mode = #tpu.pipeline_mode<synchronous>, transform_indices = @transform_2, window_bounds = array<i64: 256, 128>}, {pipeline_mode = #tpu.pipeline_mode<synchronous>, transform_indices = @transform_3, window_bounds = array<i64: 1, 128>}, {pipeline_mode = #tpu.pipeline_mode<synchronous>, transform_indices = @transform_4, window_bounds = array<i64: 128, 128>}, {pipeline_mode = #tpu.pipeline_mode<synchronous>, transform_indices = @transform_5, window_bounds = array<i64: 1, 128>}, {transform_indices = @transform_6, window_bounds = array<i64: 8, 128>}]} {
    %c0 = arith.constant 0 : index
    %c0_0 = arith.constant 0 : index
    %0 = vector.load %arg1[%c0, %c0_0] : memref<8x1xf32, #tpu.memory_space<vmem>>, vector<8x1xf32>
    %c0_1 = arith.constant 0 : index
    %c0_2 = arith.constant 0 : index
    %1 = vector.load %arg2[%c0_1, %c0_2] : memref<1x128xf32, #tpu.memory_space<vmem>>, vector<1x128xf32>
    %2 = vector.broadcast %0 : vector<8x1xf32> to vector<8x128xf32>
    %3 = vector.broadcast %1 : vector<1x128xf32> to vector<8x128xf32>
    %4 = arith.mulf %2, %3 : vector<8x128xf32>
    %5 = math.cos %4 : vector<8x128xf32>
    %6 = math.sin %4 : vector<8x128xf32>
    %7 = arith.truncf %5 : vector<8x128xf32> to vector<8x128xbf16>
    %c0_3 = arith.constant 0 : index
    %c0_4 = arith.constant 0 : index
    %8 = vector.load %arg3[%c0_3, %c0_4] : memref<256x128xbf16, #tpu.memory_space<vmem>>, vector<128x128xbf16>
    %cst = arith.constant dense<0.000000e+00> : vector<8x128xf32>
    %9 = tpu.matmul %7, %8, %cst {dimension_numbers = #tpu.dot_dimension_numbers<[1], [0], [0], [1], [0, 0, 1, 1], [], []>} : vector<8x128xbf16>, vector<128x128xbf16>, vector<8x128xf32> -> vector<8x128xf32>
    %10 = arith.truncf %6 : vector<8x128xf32> to vector<8x128xbf16>
    %c128 = arith.constant 128 : index
    %c0_5 = arith.constant 0 : index
    %11 = vector.load %arg3[%c128, %c0_5] : memref<256x128xbf16, #tpu.memory_space<vmem>>, vector<128x128xbf16>
    %cst_6 = arith.constant dense<0.000000e+00> : vector<8x128xf32>
    %12 = tpu.matmul %10, %11, %cst_6 {dimension_numbers = #tpu.dot_dimension_numbers<[1], [0], [0], [1], [0, 0, 1, 1], [], []>} : vector<8x128xbf16>, vector<128x128xbf16>, vector<8x128xf32> -> vector<8x128xf32>
    %13 = arith.addf %9, %12 : vector<8x128xf32>
    %c0_7 = arith.constant 0 : index
    %c0_8 = arith.constant 0 : index
    %14 = vector.load %arg4[%c0_7, %c0_8] : memref<1x128xf32, #tpu.memory_space<vmem>>, vector<1x128xf32>
    %15 = vector.broadcast %14 : vector<1x128xf32> to vector<8x128xf32>
    %16 = arith.addf %13, %15 : vector<8x128xf32>
    %cst_9 = arith.constant 5.000000e-01 : f32
    %17 = vector.broadcast %cst_9 : f32 to vector<8x128xf32>
    %18 = arith.mulf %17, %16 : vector<8x128xf32>
    %cst_10 = arith.constant 5.000000e-01 : f32
    %19 = vector.broadcast %cst_10 : f32 to vector<8x128xf32>
    %20 = arith.mulf %19, %16 : vector<8x128xf32>
    %21 = math.tanh %20 : vector<8x128xf32>
    %cst_11 = arith.constant 1.000000e+00 : f32
    %22 = vector.broadcast %cst_11 : f32 to vector<8x128xf32>
    %23 = arith.addf %21, %22 : vector<8x128xf32>
    %24 = arith.mulf %18, %23 : vector<8x128xf32>
    %25 = arith.truncf %24 : vector<8x128xf32> to vector<8x128xbf16>
    %c0_12 = arith.constant 0 : index
    %c0_13 = arith.constant 0 : index
    %26 = vector.load %arg5[%c0_12, %c0_13] : memref<128x128xbf16, #tpu.memory_space<vmem>>, vector<128x128xbf16>
    %cst_14 = arith.constant dense<0.000000e+00> : vector<8x128xf32>
    %27 = tpu.matmul %25, %26, %cst_14 {dimension_numbers = #tpu.dot_dimension_numbers<[1], [0], [0], [1], [0, 0, 1, 1], [], []>} : vector<8x128xbf16>, vector<128x128xbf16>, vector<8x128xf32> -> vector<8x128xf32>
    %c0_15 = arith.constant 0 : index
    %c0_16 = arith.constant 0 : index
    %28 = vector.load %arg6[%c0_15, %c0_16] : memref<1x128xf32, #tpu.memory_space<vmem>>, vector<1x128xf32>
    %29 = vector.broadcast %28 : vector<1x128xf32> to vector<8x128xf32>
    %30 = arith.addf %27, %29 : vector<8x128xf32>
    %c0_17 = arith.constant 0 : index
    %c0_18 = arith.constant 0 : index
    %31 = vector.load %arg7[%c0_17, %c0_18] : memref<8x128xf32, #tpu.memory_space<vmem>>, vector<8x128xf32>
    tpu.vector_store %arg7[%c0_17, %c0_18], %30 {strides = array<i32>} : memref<8x128xf32, #tpu.memory_space<vmem>>, vector<8x128xf32>,
    return
  }
  func.func @transform_0(%arg0: i32) -> (i32, i32) {
    %c0_i32 = arith.constant 0 : i32
    %c0_i32_0 = arith.constant 0 : i32
    return %arg0, %c0_i32 : i32, i32
  }
  func.func @transform_1(%arg0: i32) -> (i32, i32) {
    %c0_i32 = arith.constant 0 : i32
    %c0_i32_0 = arith.constant 0 : i32
    %c0_i32_1 = arith.constant 0 : i32
    return %c0_i32, %c0_i32_0 : i32, i32
  }
  func.func @transform_2(%arg0: i32) -> (i32, i32) {
    %c0_i32 = arith.constant 0 : i32
    %c0_i32_0 = arith.constant 0 : i32
    %c0_i32_1 = arith.constant 0 : i32
    return %c0_i32, %c0_i32_0 : i32, i32
  }
  func.func @transform_3(%arg0: i32) -> (i32, i32) {
    %c0_i32 = arith.constant 0 : i32
    %c0_i32_0 = arith.constant 0 : i32
    %c0_i32_1 = arith.constant 0 : i32
    return %c0_i32, %c0_i32_0 : i32, i32
  }
  func.func @transform_4(%arg0: i32) -> (i32, i32) {
    %c0_i32 = arith.constant 0 : i32
    %c0_i32_0 = arith.constant 0 : i32
    %c0_i32_1 = arith.constant 0 : i32
    return %c0_i32, %c0_i32_0 : i32, i32
  }
  func.func @transform_5(%arg0: i32) -> (i32, i32) {
    %c0_i32 = arith.constant 0 : i32
    %c0_i32_0 = arith.constant 0 : i32
    %c0_i32_1 = arith.constant 0 : i32
    return %c0_i32, %c0_i32_0 : i32, i32
  }
  func.func @transform_6(%arg0: i32) -> (i32, i32) {
    %c0_i32 = arith.constant 0 : i32
    %c0_i32_0 = arith.constant 0 : i32
    return %arg0, %c0_i32 : i32, i32
  }
}

</mosaic_0001>

<llo_original>
// kernel: tpu_custom_call.1
$region0: #{tpu_custom_call.1}
  #allocation0 [shape = 'u32[]', space=smem, size = 0x4, offset = 0x4, fixed_abs, tag = 'smem constant byte address 0x4 - core index']
  #allocation1 [shape = 'u32[144,128]{1,0:T(1,128)}', space=vmem, size = 0x12000, scoped, tag = 'internal scratch']
  %s0 = inlined_call_operand.vmem [shape: f32[8,1], index: 0, kind: input, shape index: {}]
  %s1 = inlined_call_operand.vmem [shape: f32[1,128], index: 1, kind: input, shape index: {}]
  %s2 = inlined_call_operand.hbm [shape: bf16[256,128], index: 2, kind: input, shape index: {}]
  %s3 = inlined_call_operand.vmem [shape: f32[1,128], index: 3, kind: input, shape index: {}]
  %s4 = inlined_call_operand.hbm [shape: bf16[128,128], index: 4, kind: input, shape index: {}]
  %s5 = inlined_call_operand.vmem [shape: f32[1,128], index: 5, kind: input, shape index: {}]
  %s6 = inlined_call_operand.hbm [shape: f32[8,128], index: 6, kind: output, shape index: {}]
  %s7 = sld [smem:[#allocation0]]
  $region42: #{tpu_custom_call.1} parent=0
    _
  %s9 = ssub.s32 1, %s7
  %s10 = scalar_select 0, %s9, %s7
  $region1: #{tpu_custom_call.1} parent=0
    #allocation2 [shape = 'u8[65536]{0}', space=vmem, size = 0x10000, scoped, tag = 'input window, operand 2, single buffered']
    #allocation3 [shape = 's32[1]{0}', space=sflag, size = 0x4, scoped, tag = 'scoped memory for tpu_custom_call.1']
    #allocation4 [shape = 's32[1]{0}', space=sflag, size = 0x4, scoped, tag = 'scoped memory for tpu_custom_call.1']
    #allocation5 [shape = 'u8[32768]{0}', space=vmem, size = 0x8000, scoped, tag = 'input window, operand 4, single buffered']
    #allocation6 [shape = 's32[1]{0}', space=sflag, size = 0x4, scoped, tag = 'scoped memory for tpu_custom_call.1']
    #allocation7 [shape = 'u8[4096]{0}', space=vmem, size = 0x1000, scoped, tag = 'output window, operand 0, single buffered']
    %11 = vsyncpa [#allocation3], 0
    %12 = vsyncpa [#allocation6], 0
    %13 = vsyncpa [#allocation4], 0
    // Predicated region
    $region2: #{tpu_custom_call.1} parent=1 // pred_check
      _
    $region3: #{tpu_custom_call.1} parent=1 // pred_check_branch
      %15 = sbr.rel (0) target = $region5
    $region4: #{tpu_custom_call.1} parent=1 // pred_region
      _
    $region5: #{tpu_custom_call.1} parent=1 // pred_fallthru
      _
    // Predicated region
    $region6: #{tpu_custom_call.1} parent=1 // pred_check
      _
    $region7: #{tpu_custom_call.1} parent=1 // pred_check_branch
      %17 = sbr.rel (0) target = $region9
    $region8: #{tpu_custom_call.1} parent=1 // pred_region
      _
    $region9: #{tpu_custom_call.1} parent=1 // pred_fallthru
      _
    // Predicated region
    $region10: #{tpu_custom_call.1} parent=1 // pred_check
      _
    $region11: #{tpu_custom_call.1} parent=1 // pred_check_branch
      %19 = sbr.rel (0) target = $region13
    $region12: #{tpu_custom_call.1} parent=1 // pred_region
      %s21 = ssub.s32 2048, 2048
      %22 = vsyncadd [#allocation3], %s21
      %s23 = sshll.u32 [#allocation2], 4
      %s24 = int_to_ptr.vmem [resolvable:$true] %s23
      %29 = dma.hbm_to_vmem [thread:$0]  %s2, 2048, %s24, [#allocation3], 64, 64, 4
    $region13: #{tpu_custom_call.1} parent=1 // pred_fallthru
      _
    // Predicated region
    $region14: #{tpu_custom_call.1} parent=1 // pred_check
      _
    $region15: #{tpu_custom_call.1} parent=1 // pred_check_branch
      %31 = sbr.rel (0) target = $region17
    $region16: #{tpu_custom_call.1} parent=1 // pred_region
      _
    $region17: #{tpu_custom_call.1} parent=1 // pred_fallthru
      _
    // Predicated region
    $region18: #{tpu_custom_call.1} parent=1 // pred_check
      _
    $region19: #{tpu_custom_call.1} parent=1 // pred_check_branch
      %33 = sbr.rel (0) target = $region21
    $region20: #{tpu_custom_call.1} parent=1 // pred_region
      %s35 = ssub.s32 1024, 1024
      %36 = vsyncadd [#allocation6], %s35
      %s37 = sshll.u32 [#allocation5], 4
      %s38 = int_to_ptr.vmem [resolvable:$true] %s37
      %43 = dma.hbm_to_vmem [thread:$0]  %s4, 1024, %s38, [#allocation6], 64, 64, 4
    $region21: #{tpu_custom_call.1} parent=1 // pred_fallthru
      _
    // Predicated region
    $region22: #{tpu_custom_call.1} parent=1 // pred_check
      _
    $region23: #{tpu_custom_call.1} parent=1 // pred_check_branch
      %45 = sbr.rel (0) target = $region25
    $region24: #{tpu_custom_call.1} parent=1 // pred_region
      _
    $region25: #{tpu_custom_call.1} parent=1 // pred_fallthru
      _
    // Predicated region
    $region26: #{tpu_custom_call.1} parent=1 // pred_check
      _
    $region27: #{tpu_custom_call.1} parent=1 // pred_check_branch
      %47 = sbr.rel (0) target = $region29
    $region28: #{tpu_custom_call.1} parent=1 // pred_region
      %48 = dma.done [#allocation3], 2048
    $region29: #{tpu_custom_call.1} parent=1 // pred_fallthru
      _
    // Predicated region
    $region30: #{tpu_custom_call.1} parent=1 // pred_check
      _
    $region31: #{tpu_custom_call.1} parent=1 // pred_check_branch
      %50 = sbr.rel (0) target = $region33
    $region32: #{tpu_custom_call.1} parent=1 // pred_region
      %51 = dma.done [#allocation6], 1024
    $region33: #{tpu_custom_call.1} parent=1 // pred_fallthru
      _
    %v53 = vld [vmem:[%s0] sm:$0xff]
    %v54 = vld [vmem:[%s1] sm:$0x1]
    %56 = vset.pattern.permute.xlu0 0
    %57 = vperm.xlu0 %56, %v53
    %v58 = vpop.permute.xlu0 %57
    %v61 = vlaneseq
    %v62 = vshrl.u32 %v61, 7
    %v63 = vsub.s32 0, %v62
    %v64 = vrot.slane %v54, %v63
    %v66 = vmul.f32 %v58, %v64
    %v67 = vand.u32 2147483647, %v66
    %vm68 = vcmp.le.f32.partialorder %v67, 0.7853982
    %vm69 = vcmp.lt.s32.totalorder %v66, 0
    %v70 = vand.u32 %v66, 2139095040
    %v71 = vshrl.u32 %v70, 23
    %v72 = vsub.s32 %v71, 127
    %v73 = vand.u32 2147483647, %v66
    %v74 = vand.u32 %v73, 8388607
    %v75 = vor.u32 %v74, 8388608
    %v76 = vsub.s32 0, %v75
    %v77 = vadd.s32 %v72, 1
    %vm78 = vcmp.gt.s32.totalorder %v77, 0
    %v79 = vsel %vm78, %v77, 0
    %v80 = vshrl.u32 %v79, 5
    %v81 = vand.u32 %v79, 31
    %v82 = vsub.s32 32, %v81
    %v83 = vshrl.u32 683565275, %v82
    %v84 = vshll.u32 683565275, %v81
    %v85 = vshrl.u32 2475754826, %v82
    %v86 = vor.u32 %v84, %v85
    %v87 = vshll.u32 2475754826, %v81
    %v88 = vshrl.u32 2131351028, %v82
    %v89 = vor.u32 %v87, %v88
    %v90 = vshll.u32 2131351028, %v81
    %v91 = vshrl.u32 2102212464, %v82
    %v92 = vor.u32 %v90, %v91
    %v93 = vshll.u32 2102212464, %v81
    %v94 = vshrl.u32 920167782, %v82
    %v95 = vor.u32 %v93, %v94
    %v96 = vshll.u32 920167782, %v81
    %v97 = vshrl.u32 1326507024, %v82
    %v98 = vor.u32 %v96, %v97
    %vm99 = vcmp.lt.s32.totalorder %v80, 1
    %vm100 = vcmp.lt.s32.totalorder %v80, 2
    %vm101 = vcmp.lt.s32.totalorder %v80, 3
    %vm102 = vcmp.lt.s32.totalorder %v80, 4
    %v103 = vsel %vm99, %v83, %v86
    %v104 = vsel %vm102, %v92, 2102212464
    %v105 = vsel %vm101, %v89, %v104
    %v106 = vsel %vm100, %v103, %v105
    %v107 = vsel %vm99, %v86, %v89
    %v108 = vsel %vm102, %v95, 920167782
    %v109 = vsel %vm101, %v92, %v108
    %v110 = vsel %vm100, %v107, %v109
    %v111 = vsel %vm99, %v89, %v92
    %v112 = vsel %vm102, %v98, 1326507024
    %v113 = vsel %vm101, %v95, %v112
    %v114 = vsel %vm100, %v111, %v113
    %v115 = vshll.u32 %v75, 8
    %v116 = vmul.u32.u64.compose %v115, %v114
    %v117 = vextract.low.u32 %v116
    %v118 = vextract.high.u32 %v116
    %v119 = vmul.u32.u64.compose %v115, %v110
    %v120 = vextract.low.u32 %v119
    %v121 = vextract.high.u32 %v119
    %v122 = vmul.u32 %v115, %v106
    %v123 = vadd.s32 %v118, %v120
    %vm124 = vc.u32 %v118, %v120
    %v125 = vadd.s32 %v121, 1
    %v126 = vsel %vm124, %v125, %v121
    %v127 = vadd.s32 %v122, %v126
    %v128 = vadd.s32 %v127, 536870912
    %v129 = vshrl.u32 %v128, 30
    %v130 = vshll.u32 %v129, 30
    %v131 = vsub.s32 %v127, %v130
    %vm132 = vcmp.lt.s32.totalorder %v131, 0
    %v133 = vsub.s32 0, %v131
    %v134 = vsel %vm132, %v133, %v131
    %v135 = vclz %v134
    %v136 = vsub.s32 %v135, 2
    %vm137 = vcmp.gt.s32.totalorder 0, %v136
    %v138 = vsel %vm137, 0, %v136
    %v139 = vsub.s32 32, %v138
    %v140 = vshll.u32 %v131, %v138
    %v141 = vshrl.u32 %v123, %v139
    %v142 = vor.u32 %v140, %v141
    %v143 = vsub.s32 4294967266, %v138
    %v144 = vadd.s32 %v143, 127
    %v145 = vshll.u32 %v144, 23
    %v146 = vor.u32 4788187, %v145
    %v147 = vand.u32 2147483647, %v146
    %v149 = vcvt.s32.f32 %v142
    %v150 = vmul.f32 %v149, %v147
    %v151 = vxor.u32 %v150, 2147483648
    %v152 = vsel %vm69, %v151, %v150
    %v153 = vsub.s32 4, %v129
    %v154 = vsel %vm69, %v153, %v129
    %v155 = vsel %vm68, %v66, %v152
    %v156 = vsel %vm68, 0, %v154
    %v157 = vcosq.f32.pop %v155
    %v158 = vsinq.f32.pop %v155
    %vm159 = vweird.f32 %v66
    %v160 = vand.u32 %v156, 3
    %vm161 = vcmp.lt.s32.totalorder %v160, 2
    %vm162 = vcmp.eq.s32.totalorder %v160, 0
    %v163 = vxor.u32 %v158, 2147483648
    %v164 = vsel %vm162, %v157, %v163
    %vm165 = vcmp.eq.s32.totalorder %v160, 2
    %v166 = vxor.u32 %v157, 2147483648
    %v167 = vsel %vm165, %v166, %v158
    %v168 = vsel %vm161, %v164, %v167
    %v169 = vsel %vm159, nan, %v168
    %v170 = vand.u32 2147483647, %v66
    %vm171 = vcmp.le.f32.partialorder %v170, 0.7853982
    %vm172 = vcmp.lt.s32.totalorder %v66, 0
    %v173 = vand.u32 %v66, 2139095040
    %v174 = vshrl.u32 %v173, 23
    %v175 = vsub.s32 %v174, 127
    %v176 = vand.u32 2147483647, %v66
    %v177 = vand.u32 %v176, 8388607
    %v178 = vor.u32 %v177, 8388608
    %v179 = vsub.s32 0, %v178
    %v180 = vadd.s32 %v175, 1
    %vm181 = vcmp.gt.s32.totalorder %v180, 0
    %v182 = vsel %vm181, %v180, 0
    %v183 = vshrl.u32 %v182, 5
    %v184 = vand.u32 %v182, 31
    %v185 = vsub.s32 32, %v184
    %v186 = vshrl.u32 683565275, %v185
    %v187 = vshll.u32 683565275, %v184
    %v188 = vshrl.u32 2475754826, %v185
    %v189 = vor.u32 %v187, %v188
    %v190 = vshll.u32 2475754826, %v184
    %v191 = vshrl.u32 2131351028, %v185
    %v192 = vor.u32 %v190, %v191
    %v193 = vshll.u32 2131351028, %v184
    %v194 = vshrl.u32 2102212464, %v185
    %v195 = vor.u32 %v193, %v194
    %v196 = vshll.u32 2102212464, %v184
    %v197 = vshrl.u32 920167782, %v185
    %v198 = vor.u32 %v196, %v197
    %v199 = vshll.u32 920167782, %v184
    %v200 = vshrl.u32 1326507024, %v185
    %v201 = vor.u32 %v199, %v200
    %vm202 = vcmp.lt.s32.totalorder %v183, 1
    %vm203 = vcmp.lt.s32.totalorder %v183, 2
    %vm204 = vcmp.lt.s32.totalorder %v183, 3
    %vm205 = vcmp.lt.s32.totalorder %v183, 4
    %v206 = vsel %vm202, %v186, %v189
    %v207 = vsel %vm205, %v195, 2102212464
    %v208 = vsel %vm204, %v192, %v207
    %v209 = vsel %vm203, %v206, %v208
    %v210 = vsel %vm202, %v189, %v192
    %v211 = vsel %vm205, %v198, 920167782
    %v212 = vsel %vm204, %v195, %v211
    %v213 = vsel %vm203, %v210, %v212
    %v214 = vsel %vm202, %v192, %v195
    %v215 = vsel %vm205, %v201, 1326507024
    %v216 = vsel %vm204, %v198, %v215
    %v217 = vsel %vm203, %v214, %v216
    %v218 = vshll.u32 %v178, 8
    %v219 = vmul.u32.u64.compose %v218, %v217
    %v220 = vextract.low.u32 %v219
    %v221 = vextract.high.u32 %v219
    %v222 = vmul.u32.u64.compose %v218, %v213
    %v223 = vextract.low.u32 %v222
    %v224 = vextract.high.u32 %v222
    %v225 = vmul.u32 %v218, %v209
    %v226 = vadd.s32 %v221, %v223
    %vm227 = vc.u32 %v221, %v223
    %v228 = vadd.s32 %v224, 1
    %v229 = vsel %vm227, %v228, %v224
    %v230 = vadd.s32 %v225, %v229
    %v231 = vadd.s32 %v230, 536870912
    %v232 = vshrl.u32 %v231, 30
    %v233 = vshll.u32 %v232, 30
    %v234 = vsub.s32 %v230, %v233
    %vm235 = vcmp.lt.s32.totalorder %v234, 0
    %v236 = vsub.s32 0, %v234
    %v237 = vsel %vm235, %v236, %v234
    %v238 = vclz %v237
    %v239 = vsub.s32 %v238, 2
    %vm240 = vcmp.gt.s32.totalorder 0, %v239
    %v241 = vsel %vm240, 0, %v239
    %v242 = vsub.s32 32, %v241
    %v243 = vshll.u32 %v234, %v241
    %v244 = vshrl.u32 %v226, %v242
    %v245 = vor.u32 %v243, %v244
    %v246 = vsub.s32 4294967266, %v241
    %v247 = vadd.s32 %v246, 127
    %v248 = vshll.u32 %v247, 23
    %v249 = vor.u32 4788187, %v248
    %v250 = vand.u32 2147483647, %v249
    %v252 = vcvt.s32.f32 %v245
    %v253 = vmul.f32 %v252, %v250
    %v254 = vxor.u32 %v253, 2147483648
    %v255 = vsel %vm172, %v254, %v253
    %v256 = vsub.s32 4, %v232
    %v257 = vsel %vm172, %v256, %v232
    %v258 = vsel %vm171, %v66, %v255
    %v259 = vsel %vm171, 0, %v257
    %v260 = vcosq.f32.pop %v258
    %v261 = vsinq.f32.pop %v258
    %vm262 = vweird.f32 %v66
    %v263 = vadd.s32 %v259, 3
    %v264 = vand.u32 %v263, 3
    %vm265 = vcmp.lt.s32.totalorder %v264, 2
    %vm266 = vcmp.eq.s32.totalorder %v264, 0
    %v267 = vxor.u32 %v261, 2147483648
    %v268 = vsel %vm266, %v260, %v267
    %vm269 = vcmp.eq.s32.totalorder %v264, 2
    %v270 = vxor.u32 %v260, 2147483648
    %v271 = vsel %vm269, %v270, %v261
    %v272 = vsel %vm265, %v268, %v271
    %v273 = vsel %vm262, nan, %v272
    %v274 = vpack.c.bf16 %v169, %v169
    %v275 = vld [vmem:[#allocation2] sm:$0xf]
    %v276 = vld [vmem:[#allocation2 + $0x4] sm:$0xf]
    %v277 = vld [vmem:[#allocation2 + $0x8] sm:$0xf]
    %v278 = vld [vmem:[#allocation2 + $0xc] sm:$0xf]
    %v279 = vld [vmem:[#allocation2 + $0x10] sm:$0xf]
    %v280 = vld [vmem:[#allocation2 + $0x14] sm:$0xf]
    %v281 = vld [vmem:[#allocation2 + $0x18] sm:$0xf]
    %v282 = vld [vmem:[#allocation2 + $0x1c] sm:$0xf]
    %v283 = vld [vmem:[#allocation2 + $0x20] sm:$0xf]
    %v284 = vld [vmem:[#allocation2 + $0x24] sm:$0xf]
    %v285 = vld [vmem:[#allocation2 + $0x28] sm:$0xf]
    %v286 = vld [vmem:[#allocation2 + $0x2c] sm:$0xf]
    %v287 = vld [vmem:[#allocation2 + $0x30] sm:$0xf]
    %v288 = vld [vmem:[#allocation2 + $0x34] sm:$0xf]
    %v289 = vld [vmem:[#allocation2 + $0x38] sm:$0xf]
    %v290 = vld [vmem:[#allocation2 + $0x3c] sm:$0xf]
    %v291 = vpack.c.bf16 %v273, %v273
    %v292 = vld [vmem:[#allocation2 + $0x40] sm:$0xf]
    %v293 = vld [vmem:[#allocation2 + $0x44] sm:$0xf]
    %v294 = vld [vmem:[#allocation2 + $0x48] sm:$0xf]
    %v295 = vld [vmem:[#allocation2 + $0x4c] sm:$0xf]
    %v296 = vld [vmem:[#allocation2 + $0x50] sm:$0xf]
    %v297 = vld [vmem:[#allocation2 + $0x54] sm:$0xf]
    %v298 = vld [vmem:[#allocation2 + $0x58] sm:$0xf]
    %v299 = vld [vmem:[#allocation2 + $0x5c] sm:$0xf]
    %v300 = vld [vmem:[#allocation2 + $0x60] sm:$0xf]
    %v301 = vld [vmem:[#allocation2 + $0x64] sm:$0xf]
    %v302 = vld [vmem:[#allocation2 + $0x68] sm:$0xf]
    %v303 = vld [vmem:[#allocation2 + $0x6c] sm:$0xf]
    %v304 = vld [vmem:[#allocation2 + $0x70] sm:$0xf]
    %v305 = vld [vmem:[#allocation2 + $0x74] sm:$0xf]
    %v306 = vld [vmem:[#allocation2 + $0x78] sm:$0xf]
    %v307 = vld [vmem:[#allocation2 + $0x7c] sm:$0xf]
    %v324 = vunpack.c.l.b16 %v292
    %v325 = vunpack.c.l.b16 %v293
    %v326 = vunpack.c.l.b16 %v294
    %v327 = vunpack.c.l.b16 %v295
    %v328 = vunpack.c.l.b16 %v296
    %v329 = vunpack.c.l.b16 %v297
    %v330 = vunpack.c.l.b16 %v298
    %v331 = vunpack.c.l.b16 %v299
    %v332 = vunpack.c.l.b16 %v300
    %v333 = vunpack.c.l.b16 %v301
    %v334 = vunpack.c.l.b16 %v302
    %v335 = vunpack.c.l.b16 %v303
    %v336 = vunpack.c.l.b16 %v304
    %v337 = vunpack.c.l.b16 %v305
    %v338 = vunpack.c.l.b16 %v306
    %v339 = vunpack.c.l.b16 %v307
    %v340 = vpack.c.b16 %v325, %v324
    %v341 = vpack.c.b16 %v327, %v326
    %v342 = vpack.c.b16 %v329, %v328
    %v343 = vpack.c.b16 %v331, %v330
    %v344 = vpack.c.b16 %v333, %v332
    %v345 = vpack.c.b16 %v335, %v334
    %v346 = vpack.c.b16 %v337, %v336
    %v347 = vpack.c.b16 %v339, %v338
    %356 = vmatprep.subr.bf16.mxu0 0
    %357 = vmatpush1.bf16.msra.mxu0 %v347
    %358 = vmatprep.subr.bf16.mxu0 0
    %359 = vmatpush1.bf16.msra.mxu0 %v346
    %360 = vmatprep.subr.bf16.mxu0 0
    %361 = vmatpush1.bf16.msra.mxu0 %v345
    %362 = vmatprep.subr.bf16.mxu0 0
    %363 = vmatpush1.bf16.msra.mxu0 %v344
    %364 = vmatprep.subr.bf16.mxu0 0
    %365 = vmatpush1.bf16.msra.mxu0 %v343
    %366 = vmatprep.subr.bf16.mxu0 0
    %367 = vmatpush1.bf16.msra.mxu0 %v342
    %368 = vmatprep.subr.bf16.mxu0 0
    %369 = vmatpush1.bf16.msra.mxu0 %v341
    %370 = vmatprep.subr.bf16.mxu0 0
    %371 = vmatpush1.bf16.msra.mxu0 %v340
    %372 = vmatprep.subr.bf16.mxu0 0
    %373 = vmatpush2.bf16.msra.mxu0 0
    %374 = vmatprep.subr.bf16.mxu0 0
    %375 = vmatpush2.bf16.msra.mxu0 0
    %376 = vmatprep.subr.bf16.mxu0 0
    %377 = vmatpush2.bf16.msra.mxu0 0
    %378 = vmatprep.subr.bf16.mxu0 0
    %379 = vmatpush2.bf16.msra.mxu0 0
    %380 = vmatprep.subr.bf16.mxu0 0
    %381 = vmatpush2.bf16.msra.mxu0 0
    %382 = vmatprep.subr.bf16.mxu0 0
    %383 = vmatpush2.bf16.msra.mxu0 0
    %384 = vmatprep.subr.bf16.mxu0 0
    %385 = vmatpush2.bf16.msra.mxu0 0
    %386 = vmatprep.subr.bf16.mxu0 0
    %387 = vmatpush2.bf16.msra.mxu0 0
    %388 = vmatprep.mubr.bf16.mxu0 0
    %389 = vmatmul.mubr.bf16.gmra.mxu0 %v291
    %v390 = vpop.f32.mrf.mxu0
    %v391 = vadd.f32 0.0, %v390
    %v392 = vpop.f32.mrf.mxu0
    %v393 = vpop.f32.mrf.mxu0
    %v394 = vpop.f32.mrf.mxu0
    %395 = vdwg.mxu0
    %v412 = vunpack.c.l.b16 %v275
    %v413 = vunpack.c.l.b16 %v276
    %v414 = vunpack.c.l.b16 %v277
    %v415 = vunpack.c.l.b16 %v278
    %v416 = vunpack.c.l.b16 %v279
    %v417 = vunpack.c.l.b16 %v280
    %v418 = vunpack.c.l.b16 %v281
    %v419 = vunpack.c.l.b16 %v282
    %v420 = vunpack.c.l.b16 %v283
    %v421 = vunpack.c.l.b16 %v284
    %v422 = vunpack.c.l.b16 %v285
    %v423 = vunpack.c.l.b16 %v286
    %v424 = vunpack.c.l.b16 %v287
    %v425 = vunpack.c.l.b16 %v288
    %v426 = vunpack.c.l.b16 %v289
    %v427 = vunpack.c.l.b16 %v290
    %v428 = vpack.c.b16 %v413, %v412
    %v429 = vpack.c.b16 %v415, %v414
    %v430 = vpack.c.b16 %v417, %v416
    %v431 = vpack.c.b16 %v419, %v418
    %v432 = vpack.c.b16 %v421, %v420
    %v433 = vpack.c.b16 %v423, %v422
    %v434 = vpack.c.b16 %v425, %v424
    %v435 = vpack.c.b16 %v427, %v426
    %444 = vmatprep.subr.bf16.mxu0 0
    %445 = vmatpush1.bf16.msra.mxu0 %v435
    %446 = vmatprep.subr.bf16.mxu0 0
    %447 = vmatpush1.bf16.msra.mxu0 %v434
    %448 = vmatprep.subr.bf16.mxu0 0
    %449 = vmatpush1.bf16.msra.mxu0 %v433
    %450 = vmatprep.subr.bf16.mxu0 0
    %451 = vmatpush1.bf16.msra.mxu0 %v432
    %452 = vmatprep.subr.bf16.mxu0 0
    %453 = vmatpush1.bf16.msra.mxu0 %v431
    %454 = vmatprep.subr.bf16.mxu0 0
    %455 = vmatpush1.bf16.msra.mxu0 %v430
    %456 = vmatprep.subr.bf16.mxu0 0
    %457 = vmatpush1.bf16.msra.mxu0 %v429
    %458 = vmatprep.subr.bf16.mxu0 0
    %459 = vmatpush1.bf16.msra.mxu0 %v428
    %460 = vmatprep.subr.bf16.mxu0 0
    %461 = vmatpush2.bf16.msra.mxu0 0
    %462 = vmatprep.subr.bf16.mxu0 0
    %463 = vmatpush2.bf16.msra.mxu0 0
    %464 = vmatprep.subr.bf16.mxu0 0
    %465 = vmatpush2.bf16.msra.mxu0 0
    %466 = vmatprep.subr.bf16.mxu0 0
    %467 = vmatpush2.bf16.msra.mxu0 0
    %468 = vmatprep.subr.bf16.mxu0 0
    %469 = vmatpush2.bf16.msra.mxu0 0
    %470 = vmatprep.subr.bf16.mxu0 0
    %471 = vmatpush2.bf16.msra.mxu0 0
    %472 = vmatprep.subr.bf16.mxu0 0
    %473 = vmatpush2.bf16.msra.mxu0 0
    %474 = vmatprep.subr.bf16.mxu0 0
    %475 = vmatpush2.bf16.msra.mxu0 0
    %476 = vmatprep.mubr.bf16.mxu0 0
    %477 = vmatmul.mubr.bf16.gmra.mxu0 %v274
    %v478 = vpop.f32.mrf.mxu0
    %v479 = vadd.f32 %v391, %v478
    %v480 = vpop.f32.mrf.mxu0
    %v481 = vpop.f32.mrf.mxu0
    %v482 = vpop.f32.mrf.mxu0
    %483 = vdwg.mxu0
    %v484 = vld [vmem:[%s3] sm:$0x1]
    %v486 = vlaneseq
    %v487 = vshrl.u32 %v486, 7
    %v488 = vsub.s32 0, %v487
    %v489 = vrot.slane %v484, %v488
    %v491 = vadd.f32 %v479, %v489
    %v492 = vmul.f32 %v491, 0.5
    %v493 = vtanh.pop %v492
    %v494 = vadd.f32 %v493, 1.0
    %v495 = vmul.f32 %v492, %v494
    %v496 = vpack.c.bf16 %v495, %v495
    %v497 = vld [vmem:[#allocation5] sm:$0xf]
    %v498 = vld [vmem:[#allocation5 + $0x4] sm:$0xf]
    %v499 = vld [vmem:[#allocation5 + $0x8] sm:$0xf]
    %v500 = vld [vmem:[#allocation5 + $0xc] sm:$0xf]
    %v501 = vld [vmem:[#allocation5 + $0x10] sm:$0xf]
    %v502 = vld [vmem:[#allocation5 + $0x14] sm:$0xf]
    %v503 = vld [vmem:[#allocation5 + $0x18] sm:$0xf]
    %v504 = vld [vmem:[#allocation5 + $0x1c] sm:$0xf]
    %v505 = vld [vmem:[#allocation5 + $0x20] sm:$0xf]
    %v506 = vld [vmem:[#allocation5 + $0x24] sm:$0xf]
    %v507 = vld [vmem:[#allocation5 + $0x28] sm:$0xf]
    %v508 = vld [vmem:[#allocation5 + $0x2c] sm:$0xf]
    %v509 = vld [vmem:[#allocation5 + $0x30] sm:$0xf]
    %v510 = vld [vmem:[#allocation5 + $0x34] sm:$0xf]
    %v511 = vld [vmem:[#allocation5 + $0x38] sm:$0xf]
    %v512 = vld [vmem:[#allocation5 + $0x3c] sm:$0xf]
    %v513 = vld [vmem:[%s5] sm:$0x1]
    %v515 = vlaneseq
    %v516 = vshrl.u32 %v515, 7
    %v517 = vsub.s32 0, %v516
    %v518 = vrot.slane %v513, %v517
    %v536 = vunpack.c.l.b16 %v497
    %v537 = vunpack.c.l.b16 %v498
    %v538 = vunpack.c.l.b16 %v499
    %v539 = vunpack.c.l.b16 %v500
    %v540 = vunpack.c.l.b16 %v501
    %v541 = vunpack.c.l.b16 %v502
    %v542 = vunpack.c.l.b16 %v503
    %v543 = vunpack.c.l.b16 %v504
    %v544 = vunpack.c.l.b16 %v505
    %v545 = vunpack.c.l.b16 %v506
    %v546 = vunpack.c.l.b16 %v507
    %v547 = vunpack.c.l.b16 %v508
    %v548 = vunpack.c.l.b16 %v509
    %v549 = vunpack.c.l.b16 %v510
    %v550 = vunpack.c.l.b16 %v511
    %v551 = vunpack.c.l.b16 %v512
    %v552 = vpack.c.b16 %v537, %v536
    %v553 = vpack.c.b16 %v539, %v538
    %v554 = vpack.c.b16 %v541, %v540
    %v555 = vpack.c.b16 %v543, %v542
    %v556 = vpack.c.b16 %v545, %v544
    %v557 = vpack.c.b16 %v547, %v546
    %v558 = vpack.c.b16 %v549, %v548
    %v559 = vpack.c.b16 %v551, %v550
    %568 = vmatprep.subr.bf16.mxu0 0
    %569 = vmatpush1.bf16.msra.mxu0 %v559
    %570 = vmatprep.subr.bf16.mxu0 0
    %571 = vmatpush1.bf16.msra.mxu0 %v558
    %572 = vmatprep.subr.bf16.mxu0 0
    %573 = vmatpush1.bf16.msra.mxu0 %v557
    %574 = vmatprep.subr.bf16.mxu0 0
    %575 = vmatpush1.bf16.msra.mxu0 %v556
    %576 = vmatprep.subr.bf16.mxu0 0
    %577 = vmatpush1.bf16.msra.mxu0 %v555
    %578 = vmatprep.subr.bf16.mxu0 0
    %579 = vmatpush1.bf16.msra.mxu0 %v554
    %580 = vmatprep.subr.bf16.mxu0 0
    %581 = vmatpush1.bf16.msra.mxu0 %v553
    %582 = vmatprep.subr.bf16.mxu0 0
    %583 = vmatpush1.bf16.msra.mxu0 %v552
    %584 = vmatprep.subr.bf16.mxu0 0
    %585 = vmatpush2.bf16.msra.mxu0 0
    %586 = vmatprep.subr.bf16.mxu0 0
    %587 = vmatpush2.bf16.msra.mxu0 0
    %588 = vmatprep.subr.bf16.mxu0 0
    %589 = vmatpush2.bf16.msra.mxu0 0
    %590 = vmatprep.subr.bf16.mxu0 0
    %591 = vmatpush2.bf16.msra.mxu0 0
    %592 = vmatprep.subr.bf16.mxu0 0
    %593 = vmatpush2.bf16.msra.mxu0 0
    %594 = vmatprep.subr.bf16.mxu0 0
    %595 = vmatpush2.bf16.msra.mxu0 0
    %596 = vmatprep.subr.bf16.mxu0 0
    %597 = vmatpush2.bf16.msra.mxu0 0
    %598 = vmatprep.subr.bf16.mxu0 0
    %599 = vmatpush2.bf16.msra.mxu0 0
    %600 = vmatprep.mubr.bf16.mxu0 0
    %601 = vmatmul.mubr.bf16.gmra.mxu0 %v496
    %v602 = vpop.f32.mrf.mxu0
    %v603 = vadd.f32 %v518, %v602
    %v604 = vpop.f32.mrf.mxu0
    %v605 = vpop.f32.mrf.mxu0
    %v606 = vpop.f32.mrf.mxu0
    %607 = vdwg.mxu0
    %608 = vst [vmem:[#allocation7] sm:$0xff] %v603
    // Predicated region
    $region34: #{tpu_custom_call.1} parent=1 // pred_check
      _
    $region35: #{tpu_custom_call.1} parent=1 // pred_check_branch
      %610 = sbr.rel (0) target = $region37
    $region36: #{tpu_custom_call.1} parent=1 // pred_region
      %s612 = ssub.s32 128, 128
      %613 = vsyncadd [#allocation4], %s612
      %s615 = sshll.u32 [#allocation7], 4
      %s616 = int_to_ptr.vmem [resolvable:$true] %s615
      %618 = dma.vmem_to_hbm [thread:$0]  %s616, 128, %s6, [#allocation4]
    $region37: #{tpu_custom_call.1} parent=1 // pred_fallthru
      _
    // Predicated region
    $region38: #{tpu_custom_call.1} parent=1 // pred_check
      _
    $region39: #{tpu_custom_call.1} parent=1 // pred_check_branch
      %620 = sbr.rel (0) target = $region41
    $region40: #{tpu_custom_call.1} parent=1 // pred_region
      %621 = dma.done [#allocation4], 128
    $region41: #{tpu_custom_call.1} parent=1 // pred_fallthru
      _
    %622 = vsyncpa [#allocation3], 1
    %623 = vsyncpa [#allocation6], 1
    %624 = vsyncpa [#allocation4], 1

</llo_original>
